<compile_context>
chip_gen: v5e
topology: v5e:2x2
jax: 0.10.0
libtpu: 0.0.40
codegen_flags: <defaults>
</compile_context>

<pallas_src>
import functools

import jax
import jax.numpy as jnp
from jax.experimental import pallas as pl
from jax.experimental.pallas import tpu as pltpu


def _slam_kernel(x_ref, w1_ref, b1_ref, g_ref, be_ref, wh_ref, bh_ref,
                 out_ref, *, out_dim):
    x = x_ref[...]

    # shared trunk: Linear -> LayerNorm -> ReLU -> (Dropout: identity in eval)
    h = jnp.dot(x, w1_ref[...], preferred_element_type=jnp.float32) + b1_ref[...]
    mean = jnp.mean(h, axis=-1, keepdims=True)
    d = h - mean
    var = jnp.mean(d * d, axis=-1, keepdims=True)
    hn = d * jax.lax.rsqrt(var + 1e-5)
    feat = jnp.maximum(hn * g_ref[...] + be_ref[...], 0.0)
    # TODO(synk): nn.Dropout(0.2) is only active in training mode; omitted (eval semantics).

    # fused heads: one matmul against concatenated [wd | wv | wu] -> (B, 3*O)
    z = jnp.dot(feat, wh_ref[...], preferred_element_type=jnp.float32) + bh_ref[...]
    O = out_dim
    dist = z[:, 0 * O:1 * O]
    v_logit = z[:, 1 * O:2 * O]
    u_logit = z[:, 2 * O:3 * O]

    # validity head: sigmoid with the divide on the EUP reciprocal path
    valid = pl.reciprocal(1.0 + jnp.exp(-v_logit), approx=False)
    # uncertainty head: numerically stable softplus
    uncert = jnp.maximum(u_logit, 0.0) + jnp.log1p(jnp.exp(-jnp.abs(u_logit)))
    # masked distances: sigmoid(z) > 0.5  <=>  z > 0 (avoids dependence on sigmoid rounding)
    masked = jnp.where(v_logit > 0.0, dist, 0.0)

    # single lane-dense packed output: [masked | dist | valid | uncert]
    out_ref[...] = jnp.concatenate([masked, dist, valid, uncert], axis=-1)


def slam_output(x, params, *, tile_b=128):
    """x: (B, input_dim) float32. params: dict of weights. Returns dict of (B, output_dim)."""
    B, D = x.shape
    H = params["w1"].shape[1]
    O = params["wd"].shape[1]

    # Fuse head weights/biases once on the wrapper side.
    w_heads = jnp.concatenate([params["wd"], params["wv"], params["wu"]], axis=1)  # (H, 3O)
    b_heads = jnp.concatenate([params["bd"], params["bv"], params["bu"]], axis=0)  # (3O,)
    b_heads = b_heads.reshape(1, 3 * O)

    # Batch tiling: single full-array block for small B, otherwise 128-row tiles
    # (multiple of 8 sublanes; keeps the MXU full) over a "parallel" grid axis.
    if B <= tile_b:
        TB, Bp = B, B
        xp = x
    else:
        TB = tile_b
        Bp = pl.cdiv(B, TB) * TB
        xp = jnp.pad(x, ((0, Bp - B), (0, 0))) if Bp != B else x

    grid = (Bp // TB,)

    def const_spec(shape):
        return pl.BlockSpec(shape, lambda i: (0, 0))

    in_specs = [
        pl.BlockSpec((TB, D), lambda i: (i, 0)),   # x: tiled along batch
        const_spec((D, H)),                        # w1  (VMEM-resident across grid)
        const_spec((1, H)),                        # b1
        const_spec((1, H)),                        # gamma
        const_spec((1, H)),                        # beta
        const_spec((H, 3 * O)),                    # fused head weights
        const_spec((1, 3 * O)),                    # fused head biases
    ]
    out_spec = pl.BlockSpec((TB, 4 * O), lambda i: (i, 0))
    out_shape = jax.ShapeDtypeStruct((Bp, 4 * O), jnp.float32)

    # Advisory cost estimate so XLA does not serialize this small call conservatively.
    flops = 2 * Bp * D * H + 2 * Bp * H * 3 * O + 16 * Bp * H + 12 * Bp * O
    transcendentals = 3 * Bp * O + Bp
    bytes_accessed = 4 * (Bp * D + D * H + 3 * H + H * 3 * O + 3 * O + Bp * 4 * O)
    cost = pl.CostEstimate(flops=flops, transcendentals=transcendentals,
                           bytes_accessed=bytes_accessed)

    packed = pl.pallas_call(
        functools.partial(_slam_kernel, out_dim=O),
        grid=grid,
        in_specs=in_specs,
        out_specs=out_spec,
        out_shape=out_shape,
        compiler_params=pltpu.CompilerParams(
            dimension_semantics=("parallel",)),
        cost_estimate=cost,
    )(xp, params["w1"], params["b1"].reshape(1, H),
      params["gamma"].reshape(1, H), params["beta"].reshape(1, H),
      w_heads, b_heads)

    packed = packed[:B]
    return {
        "distances": packed[:, 0 * O:1 * O],
        "raw_distances": packed[:, 1 * O:2 * O],
        "validity": packed[:, 2 * O:3 * O],
        "uncertainty": packed[:, 3 * O:4 * O],
    }


def init_params(key, input_dim, output_dim):
    hidden = input_dim // 2
    ks = jax.random.split(key, 8)

    def lin(kw, kb, fan_in, fan_out):
        bound = 1.0 / jnp.sqrt(fan_in)
        w = jax.random.uniform(kw, (fan_in, fan_out), jnp.float32, -bound, bound)
        b = jax.random.uniform(kb, (fan_out,), jnp.float32, -bound, bound)
        return w, b

    w1, b1 = lin(ks[0], ks[1], input_dim, hidden)
    wd, bd = lin(ks[2], ks[3], hidden, output_dim)
    wv, bv = lin(ks[4], ks[5], hidden, output_dim)
    wu, bu = lin(ks[6], ks[7], hidden, output_dim)
    return {
        "w1": w1, "b1": b1,
        "gamma": jnp.ones((hidden,), jnp.float32),   # LayerNorm default init
        "beta": jnp.zeros((hidden,), jnp.float32),
        "wd": wd, "bd": bd,
        "wv": wv, "bv": bv,
        "wu": wu, "bu": bu,
    }


if __name__ == "__main__":
    INPUT_DIM = 32
    OUTPUT_DIM = 8
    BATCH = 8

    key = jax.random.PRNGKey(0)
    k_param, k_x = jax.random.split(key)
    params = init_params(k_param, INPUT_DIM, OUTPUT_DIM)
    x = jax.random.normal(k_x, (BATCH, INPUT_DIM), jnp.float32)

    out = slam_output(x, params)
    jax.block_until_ready(out)

    # reference check against plain-JAX forward (eval-mode semantics)
    h = x @ params["w1"] + params["b1"]
    mean = h.mean(-1, keepdims=True)
    var = ((h - mean) ** 2).mean(-1, keepdims=True)
    feat = jnp.maximum((h - mean) / jnp.sqrt(var + 1e-5) * params["gamma"] + params["beta"], 0.0)
    dist_ref = feat @ params["wd"] + params["bd"]
    valid_ref = jax.nn.sigmoid(feat @ params["wv"] + params["bv"])
    uncert_ref = jax.nn.softplus(feat @ params["wu"] + params["bu"])
    masked_ref = dist_ref * (valid_ref > 0.5).astype(jnp.float32)

    assert jnp.allclose(out["raw_distances"], dist_ref, atol=1e-4)
    assert jnp.allclose(out["validity"], valid_ref, atol=1e-4)
    assert jnp.allclose(out["uncertainty"], uncert_ref, atol=1e-4)
    assert jnp.allclose(out["distances"], masked_ref, atol=1e-4)

    print("KERNEL_OK")
</pallas_src>

<mosaic_0001>
module attributes {stable_mosaic.version = 11 : i64} {
  func.func @_slam_kernel(%arg0: i32, %arg1: memref<8x32xf32, #tpu.memory_space<vmem>>, %arg2: memref<32x16xf32, #tpu.memory_space<vmem>>, %arg3: memref<1x16xf32, #tpu.memory_space<vmem>>, %arg4: memref<1x16xf32, #tpu.memory_space<vmem>>, %arg5: memref<1x16xf32, #tpu.memory_space<vmem>>, %arg6: memref<16x24xf32, #tpu.memory_space<vmem>>, %arg7: memref<1x24xf32, #tpu.memory_space<vmem>>, %arg8: memref<8x32xf32, #tpu.memory_space<vmem>>) attributes {dimension_semantics = [#tpu.dimension_semantics<parallel>], iteration_bounds = array<i64: 1>, scalar_prefetch = 0 : i64, scratch_operands = 0 : i64, tpu.core_type = #tpu.core_type<tc>, window_params = [{transform_indices = @transform_0, window_bounds = array<i64: 8, 32>}, {pipeline_mode = #tpu.pipeline_mode<synchronous>, transform_indices = @transform_1, window_bounds = array<i64: 32, 16>}, {pipeline_mode = #tpu.pipeline_mode<synchronous>, transform_indices = @transform_2, window_bounds = array<i64: 1, 16>}, {pipeline_mode = #tpu.pipeline_mode<synchronous>, transform_indices = @transform_3, window_bounds = array<i64: 1, 16>}, {pipeline_mode = #tpu.pipeline_mode<synchronous>, transform_indices = @transform_4, window_bounds = array<i64: 1, 16>}, {pipeline_mode = #tpu.pipeline_mode<synchronous>, transform_indices = @transform_5, window_bounds = array<i64: 16, 24>}, {pipeline_mode = #tpu.pipeline_mode<synchronous>, transform_indices = @transform_6, window_bounds = array<i64: 1, 24>}, {transform_indices = @transform_7, window_bounds = array<i64: 8, 32>}]} {
    %c0 = arith.constant 0 : index
    %c0_0 = arith.constant 0 : index
    %0 = vector.load %arg1[%c0, %c0_0] : memref<8x32xf32, #tpu.memory_space<vmem>>, vector<8x32xf32>
    %c0_1 = arith.constant 0 : index
    %c0_2 = arith.constant 0 : index
    %1 = vector.load %arg2[%c0_1, %c0_2] : memref<32x16xf32, #tpu.memory_space<vmem>>, vector<32x16xf32>
    %cst = arith.constant dense<0.000000e+00> : vector<8x16xf32>
    %2 = tpu.matmul %0, %1, %cst {dimension_numbers = #tpu.dot_dimension_numbers<[1], [0], [0], [1], [0, 0, 1, 1], [], []>} : vector<8x32xf32>, vector<32x16xf32>, vector<8x16xf32> -> vector<8x16xf32>
    %c0_3 = arith.constant 0 : index
    %c0_4 = arith.constant 0 : index
    %3 = vector.load %arg3[%c0_3, %c0_4] : memref<1x16xf32, #tpu.memory_space<vmem>>, vector<1x16xf32>
    %4 = vector.broadcast %3 : vector<1x16xf32> to vector<8x16xf32>
    %5 = arith.addf %2, %4 : vector<8x16xf32>
    %cst_5 = arith.constant dense<0.000000e+00> : vector<8xf32>
    %6 = vector.multi_reduction <add>, %5, %cst_5 [1] : vector<8x16xf32> to vector<8xf32>
    %7 = vector.shape_cast %6 : vector<8xf32> to vector<8x1xf32>
    %cst_6 = arith.constant 1.600000e+01 : f32
    %8 = vector.broadcast %cst_6 : f32 to vector<8x1xf32>
    %9 = arith.divf %7, %8 : vector<8x1xf32>
    %10 = vector.broadcast %9 : vector<8x1xf32> to vector<8x16xf32>
    %11 = arith.subf %5, %10 : vector<8x16xf32>
    %12 = arith.mulf %11, %11 : vector<8x16xf32>
    %cst_7 = arith.constant dense<0.000000e+00> : vector<8xf32>
    %13 = vector.multi_reduction <add>, %12, %cst_7 [1] : vector<8x16xf32> to vector<8xf32>
    %14 = vector.shape_cast %13 : vector<8xf32> to vector<8x1xf32>
    %cst_8 = arith.constant 1.600000e+01 : f32
    %15 = vector.broadcast %cst_8 : f32 to vector<8x1xf32>
    %16 = arith.divf %14, %15 : vector<8x1xf32>
    %cst_9 = arith.constant 9.99999974E-6 : f32
    %17 = vector.broadcast %cst_9 : f32 to vector<8x1xf32>
    %18 = arith.addf %16, %17 : vector<8x1xf32>
    %19 = math.rsqrt %18 : vector<8x1xf32>
    %20 = vector.broadcast %19 : vector<8x1xf32> to vector<8x16xf32>
    %21 = arith.mulf %11, %20 : vector<8x16xf32>
    %c0_10 = arith.constant 0 : index
    %c0_11 = arith.constant 0 : index
    %22 = vector.load %arg4[%c0_10, %c0_11] : memref<1x16xf32, #tpu.memory_space<vmem>>, vector<1x16xf32>
    %23 = vector.broadcast %22 : vector<1x16xf32> to vector<8x16xf32>
    %24 = arith.mulf %21, %23 : vector<8x16xf32>
    %c0_12 = arith.constant 0 : index
    %c0_13 = arith.constant 0 : index
    %25 = vector.load %arg5[%c0_12, %c0_13] : memref<1x16xf32, #tpu.memory_space<vmem>>, vector<1x16xf32>
    %26 = vector.broadcast %25 : vector<1x16xf32> to vector<8x16xf32>
    %27 = arith.addf %24, %26 : vector<8x16xf32>
    %cst_14 = arith.constant 0.000000e+00 : f32
    %28 = vector.broadcast %cst_14 : f32 to vector<8x16xf32>
    %29 = arith.maximumf %27, %28 : vector<8x16xf32>
    %c0_15 = arith.constant 0 : index
    %c0_16 = arith.constant 0 : index
    %30 = vector.load %arg6[%c0_15, %c0_16] : memref<16x24xf32, #tpu.memory_space<vmem>>, vector<16x24xf32>
    %cst_17 = arith.constant dense<0.000000e+00> : vector<8x24xf32>
    %31 = tpu.matmul %29, %30, %cst_17 {dimension_numbers = #tpu.dot_dimension_numbers<[1], [0], [0], [1], [0, 0, 1, 1], [], []>} : vector<8x16xf32>, vector<16x24xf32>, vector<8x24xf32> -> vector<8x24xf32>
    %c0_18 = arith.constant 0 : index
    %c0_19 = arith.constant 0 : index
    %32 = vector.load %arg7[%c0_18, %c0_19] : memref<1x24xf32, #tpu.memory_space<vmem>>, vector<1x24xf32>
    %33 = vector.broadcast %32 : vector<1x24xf32> to vector<8x24xf32>
    %34 = arith.addf %31, %33 : vector<8x24xf32>
    %35 = vector.extract_strided_slice %34 {offsets = [0, 0], sizes = [8, 8], strides = [1, 1]} : vector<8x24xf32> to vector<8x8xf32>
    %36 = vector.extract_strided_slice %34 {offsets = [0, 8], sizes = [8, 8], strides = [1, 1]} : vector<8x24xf32> to vector<8x8xf32>
    %37 = vector.extract_strided_slice %34 {offsets = [0, 16], sizes = [8, 8], strides = [1, 1]} : vector<8x24xf32> to vector<8x8xf32>
    %cst_20 = arith.constant 0.000000e+00 : f32
    %38 = vector.broadcast %cst_20 : f32 to vector<8x8xf32>
    %39 = arith.subf %38, %36 : vector<8x8xf32>
    %40 = math.exp %39 : vector<8x8xf32>
    %cst_21 = arith.constant 1.000000e+00 : f32
    %41 = vector.broadcast %cst_21 : f32 to vector<8x8xf32>
    %42 = arith.addf %41, %40 : vector<8x8xf32>
    %43 = tpu.reciprocal %42 : vector<8x8xf32> -> vector<8x8xf32>
    %cst_22 = arith.constant 0.000000e+00 : f32
    %44 = vector.broadcast %cst_22 : f32 to vector<8x8xf32>
    %45 = arith.maximumf %37, %44 : vector<8x8xf32>
    %46 = math.absf %37 : vector<8x8xf32>
    %cst_23 = arith.constant 0.000000e+00 : f32
    %47 = vector.broadcast %cst_23 : f32 to vector<8x8xf32>
    %48 = arith.subf %47, %46 : vector<8x8xf32>
    %49 = math.exp %48 : vector<8x8xf32>
    %50 = math.log1p %49 : vector<8x8xf32>
    %51 = arith.addf %45, %50 : vector<8x8xf32>
    %cst_24 = arith.constant 0.000000e+00 : f32
    %52 = vector.broadcast %cst_24 : f32 to vector<8x8xf32>
    %53 = arith.cmpf ogt, %36, %52 : vector<8x8xf32>
    %cst_25 = arith.constant 0.000000e+00 : f32
    %54 = vector.broadcast %cst_25 : f32 to vector<8x8xf32>
    %55 = arith.select %53, %35, %54 : vector<8x8xi1>, vector<8x8xf32>
    %56 = tpu.concatenate %55, %35, %43, %51 in 1 : vector<8x8xf32>, vector<8x8xf32>, vector<8x8xf32>, vector<8x8xf32> -> vector<8x32xf32>
    %c0_26 = arith.constant 0 : index
    %c0_27 = arith.constant 0 : index
    %57 = vector.load %arg8[%c0_26, %c0_27] : memref<8x32xf32, #tpu.memory_space<vmem>>, vector<8x32xf32>
    tpu.vector_store %arg8[%c0_26, %c0_27], %56 {strides = array<i32>} : memref<8x32xf32, #tpu.memory_space<vmem>>, vector<8x32xf32>,
    return
  }
  func.func @transform_0(%arg0: i32) -> (i32, i32) {
    %c0_i32 = arith.constant 0 : i32
    %c0_i32_0 = arith.constant 0 : i32
    return %arg0, %c0_i32 : i32, i32
  }
  func.func @transform_1(%arg0: i32) -> (i32, i32) {
    %c0_i32 = arith.constant 0 : i32
    %c0_i32_0 = arith.constant 0 : i32
    %c0_i32_1 = arith.constant 0 : i32
    return %c0_i32, %c0_i32_0 : i32, i32
  }
  func.func @transform_2(%arg0: i32) -> (i32, i32) {
    %c0_i32 = arith.constant 0 : i32
    %c0_i32_0 = arith.constant 0 : i32
    %c0_i32_1 = arith.constant 0 : i32
    return %c0_i32, %c0_i32_0 : i32, i32
  }
  func.func @transform_3(%arg0: i32) -> (i32, i32) {
    %c0_i32 = arith.constant 0 : i32
    %c0_i32_0 = arith.constant 0 : i32
    %c0_i32_1 = arith.constant 0 : i32
    return %c0_i32, %c0_i32_0 : i32, i32
  }
  func.func @transform_4(%arg0: i32) -> (i32, i32) {
    %c0_i32 = arith.constant 0 : i32
    %c0_i32_0 = arith.constant 0 : i32
    %c0_i32_1 = arith.constant 0 : i32
    return %c0_i32, %c0_i32_0 : i32, i32
  }
  func.func @transform_5(%arg0: i32) -> (i32, i32) {
    %c0_i32 = arith.constant 0 : i32
    %c0_i32_0 = arith.constant 0 : i32
    %c0_i32_1 = arith.constant 0 : i32
    return %c0_i32, %c0_i32_0 : i32, i32
  }
  func.func @transform_6(%arg0: i32) -> (i32, i32) {
    %c0_i32 = arith.constant 0 : i32
    %c0_i32_0 = arith.constant 0 : i32
    %c0_i32_1 = arith.constant 0 : i32
    return %c0_i32, %c0_i32_0 : i32, i32
  }
  func.func @transform_7(%arg0: i32) -> (i32, i32) {
    %c0_i32 = arith.constant 0 : i32
    %c0_i32_0 = arith.constant 0 : i32
    return %arg0, %c0_i32 : i32, i32
  }
}

</mosaic_0001>

<llo_original>
// kernel: tpu_custom_call.1
$region0: #{tpu_custom_call.1}
  #allocation0 [shape = 'u32[]', space=smem, size = 0x4, offset = 0x4, fixed_abs, tag = 'smem constant byte address 0x4 - core index']
  #allocation1 [shape = 'u32[72,128]{1,0:T(1,128)}', space=vmem, size = 0x9000, scoped, tag = 'internal scratch']
  %s0 = inlined_call_operand.vmem [shape: f32[8,32], index: 0, kind: input, shape index: {}]
  %s1 = inlined_call_operand.vmem [shape: f32[32,16], index: 1, kind: input, shape index: {}]
  %s2 = inlined_call_operand.vmem [shape: f32[1,16], index: 2, kind: input, shape index: {}]
  %s3 = inlined_call_operand.vmem [shape: f32[1,16], index: 3, kind: input, shape index: {}]
  %s4 = inlined_call_operand.vmem [shape: f32[1,16], index: 4, kind: input, shape index: {}]
  %s5 = inlined_call_operand.vmem [shape: f32[16,24], index: 5, kind: input, shape index: {}]
  %s6 = inlined_call_operand.vmem [shape: f32[1,24], index: 6, kind: input, shape index: {}]
  %s7 = inlined_call_operand.hbm [shape: f32[8,32], index: 7, kind: output, shape index: {}]
  %s8 = sld [smem:[#allocation0]]
  $region38: #{tpu_custom_call.1} parent=0
    _
  %s10 = ssub.s32 1, %s8
  %s11 = scalar_select 0, %s10, %s8
  $region1: #{tpu_custom_call.1} parent=0
    #allocation2 [shape = 'u8[4096]{0}', space=vmem, size = 0x1000, scoped, tag = 'output window, operand 0, single buffered']
    #allocation3 [shape = 's32[1]{0}', space=sflag, size = 0x4, scoped, tag = 'scoped memory for tpu_custom_call.1']
    %12 = vsyncpa [#allocation3], 0
    // Predicated region
    $region2: #{tpu_custom_call.1} parent=1 // pred_check
      _
    $region3: #{tpu_custom_call.1} parent=1 // pred_check_branch
      %14 = sbr.rel (0) target = $region5
    $region4: #{tpu_custom_call.1} parent=1 // pred_region
      _
    $region5: #{tpu_custom_call.1} parent=1 // pred_fallthru
      _
    // Predicated region
    $region6: #{tpu_custom_call.1} parent=1 // pred_check
      _
    $region7: #{tpu_custom_call.1} parent=1 // pred_check_branch
      %16 = sbr.rel (0) target = $region9
    $region8: #{tpu_custom_call.1} parent=1 // pred_region
      _
    $region9: #{tpu_custom_call.1} parent=1 // pred_fallthru
      _
    // Predicated region
    $region10: #{tpu_custom_call.1} parent=1 // pred_check
      _
    $region11: #{tpu_custom_call.1} parent=1 // pred_check_branch
      %18 = sbr.rel (0) target = $region13
    $region12: #{tpu_custom_call.1} parent=1 // pred_region
      _
    $region13: #{tpu_custom_call.1} parent=1 // pred_fallthru
      _
    // Predicated region
    $region14: #{tpu_custom_call.1} parent=1 // pred_check
      _
    $region15: #{tpu_custom_call.1} parent=1 // pred_check_branch
      %20 = sbr.rel (0) target = $region17
    $region16: #{tpu_custom_call.1} parent=1 // pred_region
      _
    $region17: #{tpu_custom_call.1} parent=1 // pred_fallthru
      _
    // Predicated region
    $region18: #{tpu_custom_call.1} parent=1 // pred_check
      _
    $region19: #{tpu_custom_call.1} parent=1 // pred_check_branch
      %22 = sbr.rel (0) target = $region21
    $region20: #{tpu_custom_call.1} parent=1 // pred_region
      _
    $region21: #{tpu_custom_call.1} parent=1 // pred_fallthru
      _
    // Predicated region
    $region22: #{tpu_custom_call.1} parent=1 // pred_check
      _
    $region23: #{tpu_custom_call.1} parent=1 // pred_check_branch
      %24 = sbr.rel (0) target = $region25
    $region24: #{tpu_custom_call.1} parent=1 // pred_region
      _
    $region25: #{tpu_custom_call.1} parent=1 // pred_fallthru
      _
    // Predicated region
    $region26: #{tpu_custom_call.1} parent=1 // pred_check
      _
    $region27: #{tpu_custom_call.1} parent=1 // pred_check_branch
      %26 = sbr.rel (0) target = $region29
    $region28: #{tpu_custom_call.1} parent=1 // pred_region
      _
    $region29: #{tpu_custom_call.1} parent=1 // pred_fallthru
      _
    %v27 = vld [vmem:[%s0] sm:$0xff]
    %v28 = vld [vmem:[%s1] sm:$0xff]
    %v29 = vld [vmem:[%s1 + $0x8] sm:$0xff]
    %v30 = vld [vmem:[%s1 + $0x10] sm:$0xff]
    %v31 = vld [vmem:[%s1 + $0x18] sm:$0xff]
    %v32 = vld [vmem:[%s2] sm:$0x1]
    %v34 = vperm.slane %v32, 0
    %vm36 = vcmask 261120
    %v38 = vsel %vm36, %v27, 0
    %40 = vmatpush.msra.mxu0 0.0
    %41 = vmatpush.msra.mxu0 0.0
    %42 = vmatpush.msra.mxu0 0.0
    %43 = vmatpush.msra.mxu0 0.0
    %44 = vmatpush.msra.mxu0 0.0
    %45 = vmatpush.msra.mxu0 0.0
    %46 = vmatpush.msra.mxu0 0.0
    %47 = vmatpush.msra.mxu0 0.0
    %48 = vmatpush.msra.mxu0 0.0
    %49 = vmatpush.msra.mxu0 0.0
    %50 = vmatpush.msra.mxu0 0.0
    %51 = vmatpush.msra.mxu0 0.0
    %52 = vmatpush.msra.mxu0 %v31
    %53 = vmatpush.msra.mxu0 %v30
    %54 = vmatpush.msra.mxu0 %v29
    %55 = vmatpush.msra.mxu0 %v28
    %56 = vmatmul.f32.gmra.mxu0 %v38
    %v57 = vpop.f32.mrf.mxu0
    %v58 = vadd.f32 %v34, %v57
    %59 = vdwg.mxu0
    %vm60 = vcmask 130048
    %v61 = vsel %vm60, %v58, 0.0
    %62 = vadd.xlane.f32.xlu0 %v61
    %v63 = vpop.xlane.xlu0 %62
    %v64 = vrcp.pop 16.0
    %v65 = vmul.f32 16.0, %v64
    %v66 = vsub.f32 1.0, %v65
    %v67 = vmul.f32 %v64, %v66
    %v68 = vadd.f32 %v64, %v67
    %vm69 = vweird.f32 %v64
    %v70 = vsel %vm69, %v64, %v68
    %v71 = vmul.f32 %v63, %v70
    %v72 = vsub.f32 %v58, %v71
    %v73 = vmul.f32 %v72, %v72
    %v74 = vsel %vm60, %v73, 0.0
    %75 = vadd.xlane.f32.xlu0 %v74
    %v76 = vpop.xlane.xlu0 %75
    %v77 = vmul.f32 %v76, %v70
    %v78 = vadd.f32 %v77, 1e-05
    %v79 = vrsqrt.pop %v78
    %v80 = vmul.f32 %v79, %v78
    %v81 = vmul.f32 %v80, %v79
    %v82 = vmul.f32 0.5, %v81
    %v83 = vsub.f32 1.5, %v82
    %v84 = vmul.f32 %v79, %v83
    %vm85 = vweird.f32 %v78
    %vm86 = vweird.f32 %v79
    %vm87 = vmor %vm85, %vm86
    %v88 = vsel %vm87, %v79, %v84
    %v89 = vmul.f32 %v72, %v88
    %v90 = vld [vmem:[%s3] sm:$0x1]
    %v92 = vperm.slane %v90, 0
    %v94 = vmul.f32 %v89, %v92
    %v95 = vld [vmem:[%s4] sm:$0x1]
    %v97 = vperm.slane %v95, 0
    %v99 = vadd.f32 %v94, %v97
    %v100 = vmax.f32 %v99, 0.0
    %v101 = vld [vmem:[%s5] sm:$0xff]
    %v102 = vld [vmem:[%s5 + $0x8] sm:$0xff]
    %v103 = vld [vmem:[%s6] sm:$0x1]
    %v105 = vperm.slane %v103, 0
    %v108 = vsel %vm60, %v100, 0
    %110 = vmatpush.msra.mxu0 0.0
    %111 = vmatpush.msra.mxu0 0.0
    %112 = vmatpush.msra.mxu0 0.0
    %113 = vmatpush.msra.mxu0 0.0
    %114 = vmatpush.msra.mxu0 0.0
    %115 = vmatpush.msra.mxu0 0.0
    %116 = vmatpush.msra.mxu0 0.0
    %117 = vmatpush.msra.mxu0 0.0
    %118 = vmatpush.msra.mxu0 0.0
    %119 = vmatpush.msra.mxu0 0.0
    %120 = vmatpush.msra.mxu0 0.0
    %121 = vmatpush.msra.mxu0 0.0
    %122 = vmatpush.msra.mxu0 0.0
    %123 = vmatpush.msra.mxu0 0.0
    %124 = vmatpush.msra.mxu0 %v102
    %125 = vmatpush.msra.mxu0 %v101
    %126 = vmatmul.f32.gmra.mxu0 %v108
    %v127 = vpop.f32.mrf.mxu0
    %v128 = vadd.f32 %v105, %v127
    %129 = vdwg.mxu0
    %v130 = vsub.f32 0.0, %v128
    %v131 = vmul.f32 %v130, 1.442695
    %v132 = vpow.pop %v131
    %v133 = vadd.f32 %v132, 1.0
    %v134 = vrcp.pop %v133
    %v135 = vmul.f32 %v133, %v134
    %v136 = vsub.f32 1.0, %v135
    %v137 = vmul.f32 %v134, %v136
    %v138 = vadd.f32 %v134, %v137
    %vm139 = vweird.f32 %v133
    %vm140 = vweird.f32 %v134
    %vm141 = vmor %vm139, %vm140
    %v142 = vsel %vm141, %v134, %v138
    %v143 = vand.u32 2147483647, %v133
    %vm144 = vcmp.eq.f32.partialorder %v143, 8.507059e+37
    %v145 = vand.u32 %v133, 2147483648
    %v146 = vor.u32 1.1754944e-38, %v145
    %v147 = vsel %vm144, %v146, %v142
    %v148 = vmax.f32 %v128, 0.0
    %v149 = vand.u32 2147483647, %v128
    %v150 = vsub.f32 0.0, %v149
    %v151 = vmul.f32 %v150, 1.442695
    %v152 = vpow.pop %v151
    %v153 = vadd.f32 %v152, 1.0
    %v154 = vlog2.pop %v153
    %v155 = vmul.f32 %v154, 0.6931472
    %v156 = vmul.f32 -0.5, %v152
    %v157 = vadd.f32 %v156, 1.0
    %v158 = vmul.f32 %v157, %v152
    %v159 = vand.u32 2147483647, %v152
    %vm160 = vcmp.lt.f32.partialorder %v159, 0.0004427343
    %v161 = vsel %vm160, %v158, %v155
    %v162 = vadd.f32 %v148, %v161
    %vm163 = vcmp.gt.f32.partialorder %v128, 0.0
    %165 = vrot.lane.b32.xlu0 %v128, 8
    %v166 = vpop.permute.xlu0 %165
    %v168 = vsel %vm163, %v166, 0.0
    %170 = vrot.lane.b32.xlu0 %v168, 120
    %v171 = vpop.permute.xlu0 %170
    %174 = vrot.lane.b32.xlu0 %v147, 8
    %v175 = vpop.permute.xlu0 %174
    %178 = vrot.lane.b32.xlu0 %v162, 8
    %v179 = vpop.permute.xlu0 %178
    %vm181 = vcmask 64512
    %v182 = vsel %vm181, %v171, %v166
    %v183 = vsel %vm60, %v182, %v175
    %vm184 = vcmask 195584
    %v185 = vsel %vm184, %v183, %v179
    %186 = vst.msk [vmem:[#allocation2] sm:$0xff] %vm36, %v185
    // Predicated region
    $region30: #{tpu_custom_call.1} parent=1 // pred_check
      _
    $region31: #{tpu_custom_call.1} parent=1 // pred_check_branch
      %188 = sbr.rel (0) target = $region33
    $region32: #{tpu_custom_call.1} parent=1 // pred_region
      %190 = vsyncadd [#allocation3], 0
      %s192 = sshll.u32 [#allocation2], 4
      %s193 = int_to_ptr.vmem [resolvable:$true] %s192
      %s194 = sshll.u32 %s7, 4
      %s195 = int_to_ptr.hbm [resolvable:$true] %s194
      %197 = dma.vmem_to_hbm [thread:$0]  %s193, 128, %s195, [#allocation3]
    $region33: #{tpu_custom_call.1} parent=1 // pred_fallthru
      _
    // Predicated region
    $region34: #{tpu_custom_call.1} parent=1 // pred_check
      _
    $region35: #{tpu_custom_call.1} parent=1 // pred_check_branch
      %199 = sbr.rel (0) target = $region37
    $region36: #{tpu_custom_call.1} parent=1 // pred_region
      %201 = dma.done [#allocation3], 128
    $region37: #{tpu_custom_call.1} parent=1 // pred_fallthru
      _
    %202 = vsyncpa [#allocation3], 1

</llo_original>
